<compile_context>
chip_gen: v7x
topology: tpu7x:2x2x1
jax: 0.10.0
libtpu: 0.0.40
codegen_flags: <defaults>
</compile_context>

<pallas_src>
import jax
import jax.numpy as jnp
from jax.experimental import pallas as pl
from jax.experimental.pallas import tpu as pltpu


# ----------------------------- tiling config --------------------------------

_VMEM_LIMIT = 32 * 1024 * 1024
_TM_MAX = 8192          # lane tile; per-tile VMEM is small for these channel counts


def _round_up(x, mult):
    return ((x + mult - 1) // mult) * mult


def _pad_axis(x, axis, mult):
    pad = (-x.shape[axis]) % mult
    if pad == 0:
        return x
    widths = [(0, 0)] * x.ndim
    widths[axis] = (0, pad)
    return jnp.pad(x, widths)


def _pad_to(x, axis, size):
    pad = size - x.shape[axis]
    if pad == 0:
        return x
    widths = [(0, 0)] * x.ndim
    widths[axis] = (0, pad)
    return jnp.pad(x, widths)


def _tile_m(m):
    """Pick lane tile TM (multiple of 128) and padded M.

    Always lane-dense (>=128-wide unmasked stores); prefers an even number of
    tiles when M is large enough so both v7x TensorCores get work.
    """
    m128 = _round_up(m, 128)
    if m128 <= 256:
        return m128, m128
    if m128 <= _TM_MAX:
        if m128 % 256 == 0:
            return m128 // 2, m128        # two even tiles, no extra padding
        return m128, m128
    tm = _TM_MAX
    return tm, _round_up(m128, tm)


def _compiler_params():
    return pltpu.CompilerParams(dimension_semantics=("parallel",),
                                vmem_limit_bytes=_VMEM_LIMIT)


# ----------------------------- Pallas kernels --------------------------------

def _stem_left1_kernel(x_ref, wg_ref, bg_ref, wl_ref, bl_ref,
                       stem_ref, left1_ref):
    """Stage 1: GhostConv(3->16, 3x3, s2)+BN+ReLU, with left1 1x1(16->8)+BN+ReLU
    fused into the epilogue.

    x_ref:     (K, TM)  bf16  all 9 taps stacked along K (zero-padded to 8n)
    wg_ref:    (16, K)  bf16  scale-folded ghost weights
    bg_ref:    (16, 1)  f32   stem BN bias
    wl_ref:    (8, 16)  bf16  scale-folded left1 weights
    bl_ref:    (8, 1)   f32   left1 BN bias
    stem_ref:  (16, TM) bf16  output 1 (stem)
    left1_ref: (8, TM)  bf16  output 2 (left1)
    """
    acc = jnp.dot(wg_ref[...], x_ref[...], preferred_element_type=jnp.float32)
    stem = jnp.maximum(acc + bg_ref[...], 0.0).astype(jnp.bfloat16)
    stem_ref[...] = stem
    l1 = jnp.dot(wl_ref[...], stem, preferred_element_type=jnp.float32)
    left1_ref[...] = jnp.maximum(l1 + bl_ref[...], 0.0).astype(jnp.bfloat16)


def _left2_pool_kernel(pool_ref, conv_ref, w_ref, b_ref, o_ref):
    """Fused left2 3x3/s2 conv (8->16)+BN+ReLU and 3x3/s2 MaxPool on stem.

    pool_ref: (9, 16, TM) bf16  taps of stem (stem >= 0, zero pad == ignore-pad)
    conv_ref: (72, TM)    bf16  taps of left1 stacked along K
    w_ref:    (16, 72)    bf16  scale-folded left2 weights
    b_ref:    (16, 1)     f32
    o_ref:    (32, TM)    bf16  rows 0:16 conv (left) branch, 16:32 pool (right)
    """
    cout = w_ref.shape[0]
    acc = jnp.dot(w_ref[...], conv_ref[...], preferred_element_type=jnp.float32)
    o_ref[:cout, :] = jnp.maximum(acc + b_ref[...], 0.0).astype(o_ref.dtype)

    mx = pool_ref[0].astype(jnp.float32)
    for t in range(1, pool_ref.shape[0]):
        mx = jnp.maximum(mx, pool_ref[t].astype(jnp.float32))
    o_ref[cout:, :] = mx.astype(o_ref.dtype)


def _conv_kernel(x_ref, w_ref, b_ref, o_ref):
    """Generic conv+BN(bias)+ReLU stage as a single K-deep dot per tile."""
    acc = jnp.dot(w_ref[...], x_ref[...], preferred_element_type=jnp.float32)
    o_ref[...] = jnp.maximum(acc + b_ref[...], 0.0).astype(o_ref.dtype)


# ----------------------------- kernel wrappers --------------------------------

def stem_left1(x_taps, wg, bg, wl, bl):
    """x_taps: (K, M) bf16; wg: (16, K); wl: (8, 16); bg/bl: (C,1) f32
    -> stem (16, M) bf16, left1 (8, M) bf16."""
    x_taps = _pad_axis(x_taps, 0, 8)
    wg = _pad_axis(wg, 1, 8)
    k, m = x_taps.shape
    c_stem = wg.shape[0]
    c_l1 = wl.shape[0]

    tm, m_pad = _tile_m(m)
    x_taps = _pad_to(x_taps, 1, m_pad)

    flops = 2 * m_pad * (k * c_stem + c_stem * c_l1)
    bytes_acc = (x_taps.size * 2 + wg.size * 2 + wl.size * 2
                 + (c_stem + c_l1) * (4 + m_pad * 2))

    stem, left1 = pl.pallas_call(
        _stem_left1_kernel,
        out_shape=(jax.ShapeDtypeStruct((c_stem, m_pad), jnp.bfloat16),
                   jax.ShapeDtypeStruct((c_l1, m_pad), jnp.bfloat16)),
        grid_spec=pltpu.PrefetchScalarGridSpec(
            num_scalar_prefetch=0,
            grid=(m_pad // tm,),
            in_specs=[
                pl.BlockSpec((k, tm), lambda i: (0, i)),
                pl.BlockSpec((c_stem, k), lambda i: (0, 0)),
                pl.BlockSpec((c_stem, 1), lambda i: (0, 0)),
                pl.BlockSpec((c_l1, c_stem), lambda i: (0, 0)),
                pl.BlockSpec((c_l1, 1), lambda i: (0, 0)),
            ],
            out_specs=[pl.BlockSpec((c_stem, tm), lambda i: (0, i)),
                       pl.BlockSpec((c_l1, tm), lambda i: (0, i))],
        ),
        compiler_params=_compiler_params(),
        cost_estimate=pl.CostEstimate(flops=flops, transcendentals=0,
                                      bytes_accessed=bytes_acc),
    )(x_taps, wg, bg, wl, bl)
    return stem[:, :m], left1[:, :m]


def left2_pool(pool_taps, conv_taps, w, b):
    """pool_taps: (9, 16, M) bf16; conv_taps: (72, M) bf16; w: (16, 72) bf16;
    b: (16,1) f32 -> (32, M) bf16 = [left ; right]."""
    conv_taps = _pad_axis(conv_taps, 0, 8)
    w = _pad_axis(w, 1, 8)
    t, c_pool, m = pool_taps.shape
    k = conv_taps.shape[0]
    cout = w.shape[0]

    tm, m_pad = _tile_m(m)
    pool_taps = _pad_to(pool_taps, 2, m_pad)
    conv_taps = _pad_to(conv_taps, 1, m_pad)

    flops = 2 * m_pad * k * cout + t * c_pool * m_pad
    bytes_acc = ((pool_taps.size + conv_taps.size + w.size) * 2
                 + cout * 4 + (cout + c_pool) * m_pad * 2)

    out = pl.pallas_call(
        _left2_pool_kernel,
        out_shape=jax.ShapeDtypeStruct((cout + c_pool, m_pad), jnp.bfloat16),
        grid_spec=pltpu.PrefetchScalarGridSpec(
            num_scalar_prefetch=0,
            grid=(m_pad // tm,),
            in_specs=[
                pl.BlockSpec((t, c_pool, tm), lambda i: (0, 0, i)),
                pl.BlockSpec((k, tm), lambda i: (0, i)),
                pl.BlockSpec((cout, k), lambda i: (0, 0)),
                pl.BlockSpec((cout, 1), lambda i: (0, 0)),
            ],
            out_specs=pl.BlockSpec((cout + c_pool, tm), lambda i: (0, i)),
        ),
        compiler_params=_compiler_params(),
        cost_estimate=pl.CostEstimate(flops=flops, transcendentals=0,
                                      bytes_accessed=bytes_acc),
    )(pool_taps, conv_taps, w, b)
    return out[:, :m]


def conv_bn_relu(x_taps, w, b, out_dtype=jnp.float32):
    """x_taps: (K, M) bf16; w: (Cout, K) bf16; b: (Cout,1) f32 -> (Cout, M)."""
    x_taps = _pad_axis(x_taps, 0, 8)
    w = _pad_axis(w, 1, 8)
    k, m = x_taps.shape
    cout = w.shape[0]

    tm, m_pad = _tile_m(m)
    x_taps = _pad_to(x_taps, 1, m_pad)

    out_bytes = 2 if out_dtype == jnp.bfloat16 else 4
    flops = 2 * m_pad * k * cout
    bytes_acc = (x_taps.size * 2 + w.size * 2 + cout * 4
                 + cout * m_pad * out_bytes)

    out = pl.pallas_call(
        _conv_kernel,
        out_shape=jax.ShapeDtypeStruct((cout, m_pad), out_dtype),
        grid_spec=pltpu.PrefetchScalarGridSpec(
            num_scalar_prefetch=0,
            grid=(m_pad // tm,),
            in_specs=[
                pl.BlockSpec((k, tm), lambda i: (0, i)),
                pl.BlockSpec((cout, k), lambda i: (0, 0)),
                pl.BlockSpec((cout, 1), lambda i: (0, 0)),
            ],
            out_specs=pl.BlockSpec((cout, tm), lambda i: (0, i)),
        ),
        compiler_params=_compiler_params(),
        cost_estimate=pl.CostEstimate(flops=flops, transcendentals=0,
                                      bytes_accessed=bytes_acc),
    )(x_taps, w, b)
    return out[:, :m]


# ------------------------------- glue (JAX) -----------------------------------

def conv_taps_cnhw(x, kh, kw, stride, padding):
    """x: (C, N, H, W) -> ((kh*kw*C, N*Ho*Wo), Ho, Wo).

    Rows are tap-major / channel-minor (K index = t*C + c), matching the
    weight flattening in w_taps_scaled.  Zero padding (exact for the convs;
    exact for the maxpool taps because its input is post-ReLU, i.e. >= 0).
    """
    # TODO(synk): this tap gather is still XLA glue that materializes a 9x tap
    # tensor in HBM; an in-kernel halo-tile DMA gather (manual make_async_copy
    # of spatial tiles) would remove that remaining read inflation.
    c, n, h, w = x.shape
    xp = jnp.pad(x, ((0, 0), (0, 0), (padding, padding), (padding, padding)))
    ho = (h + 2 * padding - kh) // stride + 1
    wo = (w + 2 * padding - kw) // stride + 1
    taps = []
    for i in range(kh):
        for j in range(kw):
            v = jax.lax.slice(
                xp, (0, 0, i, j),
                (c, n, i + (ho - 1) * stride + 1, j + (wo - 1) * stride + 1),
                (1, 1, stride, stride))                       # (C, N, Ho, Wo)
            taps.append(v.reshape(c, n * ho * wo))
    return jnp.concatenate(taps, axis=0), ho, wo


def bn_fold(gamma, beta, mean, var, eps=1e-5):
    scale = gamma / jnp.sqrt(var + eps)
    bias = (beta - mean * scale).reshape(-1, 1).astype(jnp.float32)
    return scale, bias


def w_taps_scaled(w_hwio, scale):
    """(kh, kw, Cin, Cout) HWIO weights + per-Cout BN scale ->
    (Cout, kh*kw*Cin) bf16 with tap-major / channel-minor K ordering."""
    kh, kw, cin, cout = w_hwio.shape
    w = w_hwio * scale[None, None, None, :]
    w = jnp.transpose(w.reshape(kh * kw, cin, cout), (2, 0, 1))
    return w.reshape(cout, kh * kw * cin).astype(jnp.bfloat16)


# ------------------------------ parameters ------------------------------------

def make_params(key):
    ks = jax.random.split(key, 24)
    k = iter(ks)

    def conv_w(rng, kh, kw, cin, cout):
        # HWIO layout; equivalent to PyTorch (cout, cin, kh, kw) transposed.
        return jax.random.normal(rng, (kh, kw, cin, cout), jnp.float32) * 0.1

    def bn(rng_a, rng_b, rng_c, rng_d, c):
        gamma = 0.8 + 0.4 * jax.random.uniform(rng_a, (c,), jnp.float32)
        beta = 0.05 * jax.random.normal(rng_b, (c,), jnp.float32)
        mean = 0.05 * jax.random.normal(rng_c, (c,), jnp.float32)
        var = 0.9 + 0.2 * jax.random.uniform(rng_d, (c,), jnp.float32)
        return gamma, beta, mean, var

    return {
        # GhostConv(3,16,3,stride=2): primary 3x3/s2 (3->8), depthwise 1x1 (8->8)
        "w_primary": conv_w(next(k), 3, 3, 3, 8),
        "w_dw": jax.random.normal(next(k), (8,), jnp.float32) * 0.1,
        "bn_stem": bn(next(k), next(k), next(k), next(k), 16),
        # left: ConvBNLU(16,8,1,s1,p0) then ConvBNLU(8,16,3,s2,p1)
        "w_left1": conv_w(next(k), 1, 1, 16, 8),
        "bn_left1": bn(next(k), next(k), next(k), next(k), 8),
        "w_left2": conv_w(next(k), 3, 3, 8, 16),
        "bn_left2": bn(next(k), next(k), next(k), next(k), 16),
        # fuse: ConvBNLU(32,16,3,s1,p1)
        "w_fuse": conv_w(next(k), 3, 3, 32, 16),
        "bn_fuse": bn(next(k), next(k), next(k), next(k), 16),
    }


# ------------------------------ forward pass -----------------------------------

@jax.jit
def stem_block_forward(x_nchw, params):
    n = x_nchw.shape[0]
    x = jnp.transpose(x_nchw, (1, 0, 2, 3)).astype(jnp.bfloat16)   # (3, N, H, W)

    # --- stage 1: GhostConv(3->16, 3x3, s2)+BN+ReLU, left1 fused into epilogue
    # cheap_operation is a depthwise 1x1 with no BN/ReLU in between, so it
    # folds exactly into the primary weights: W_ghost = [W, W * dw].
    w_prim = params["w_primary"]                                    # (3,3,3,8)
    w_ghost = jnp.concatenate(
        [w_prim, w_prim * params["w_dw"][None, None, None, :]], axis=-1)
    s_stem, b_stem = bn_fold(*params["bn_stem"])
    s_l1, b_l1 = bn_fold(*params["bn_left1"])
    wg = w_taps_scaled(w_ghost, s_stem)                             # (16, 27)
    wl = w_taps_scaled(params["w_left1"], s_l1)                     # (8, 16)

    x_taps, h1, w1 = conv_taps_cnhw(x, 3, 3, stride=2, padding=1)   # (27, M1)
    stem, left1 = stem_left1(x_taps, wg, b_stem, wl, b_l1)          # bf16, bf16

    # --- fused: left2 3x3/s2 conv (8->16)+BN+ReLU and 3x3/s2 MaxPool on stem
    stem_cnhw = stem.reshape(16, n, h1, w1)        # free reshape, no transpose
    left1_cnhw = left1.reshape(8, n, h1, w1)
    pool_taps, h2, w2 = conv_taps_cnhw(stem_cnhw, 3, 3, stride=2, padding=1)
    l1_taps, _, _ = conv_taps_cnhw(left1_cnhw, 3, 3, stride=2, padding=1)
    pool_taps = pool_taps.reshape(9, 16, n * h2 * w2)
    s_l2, b_l2 = bn_fold(*params["bn_left2"])
    cat = left2_pool(pool_taps, l1_taps,
                     w_taps_scaled(params["w_left2"], s_l2), b_l2)  # (32, M2)

    # --- fuse: ConvBNLU(32->16, 3x3, s1, p1) --------------------------------
    cat_cnhw = cat.reshape(32, n, h2, w2)
    f_taps, h3, w3 = conv_taps_cnhw(cat_cnhw, 3, 3, stride=1, padding=1)
    s_f, b_f = bn_fold(*params["bn_fuse"])
    out = conv_bn_relu(f_taps, w_taps_scaled(params["w_fuse"], s_f), b_f)

    return jnp.transpose(out.reshape(16, n, h3, w3), (1, 0, 2, 3))  # NCHW f32


# ---------------------------------- main ----------------------------------------

if __name__ == "__main__":
    key = jax.random.PRNGKey(0)
    k_x, k_p = jax.random.split(key)

    # Small NCHW input consistent with StemBlock (RGB input, 3 channels).
    x = jax.random.normal(k_x, (2, 3, 16, 16), jnp.float32)
    params = make_params(k_p)

    y = stem_block_forward(x, params)
    y = jax.block_until_ready(y)

    assert y.shape == (2, 16, 4, 4), y.shape          # /4 spatial, 16 channels
    assert bool(jnp.all(jnp.isfinite(y)))
    assert bool(jnp.all(y >= 0.0))                    # final ReLU

    print("KERNEL_OK")
</pallas_src>

<mosaic_0001>
module attributes {stable_mosaic.version = 11 : i64} {
  func.func @_stem_left1_kernel(%arg0: i32, %arg1: memref<32x128xbf16, #tpu.memory_space<vmem>>, %arg2: memref<16x32xbf16, #tpu.memory_space<vmem>>, %arg3: memref<16x1xf32, #tpu.memory_space<vmem>>, %arg4: memref<8x16xbf16, #tpu.memory_space<vmem>>, %arg5: memref<8x1xf32, #tpu.memory_space<vmem>>, %arg6: memref<16x128xbf16, #tpu.memory_space<vmem>>, %arg7: memref<8x128xbf16, #tpu.memory_space<vmem>>) attributes {dimension_semantics = [#tpu.dimension_semantics<parallel>], iteration_bounds = array<i64: 1>, scalar_prefetch = 0 : i64, scratch_operands = 0 : i64, tpu.core_type = #tpu.core_type<tc>, window_params = [{transform_indices = @transform_0, window_bounds = array<i64: 32, 128>}, {pipeline_mode = #tpu.pipeline_mode<synchronous>, transform_indices = @transform_1, window_bounds = array<i64: 16, 32>}, {pipeline_mode = #tpu.pipeline_mode<synchronous>, transform_indices = @transform_2, window_bounds = array<i64: 16, 1>}, {pipeline_mode = #tpu.pipeline_mode<synchronous>, transform_indices = @transform_3, window_bounds = array<i64: 8, 16>}, {pipeline_mode = #tpu.pipeline_mode<synchronous>, transform_indices = @transform_4, window_bounds = array<i64: 8, 1>}, {transform_indices = @transform_5, window_bounds = array<i64: 16, 128>}, {transform_indices = @transform_6, window_bounds = array<i64: 8, 128>}]} {
    %c0 = arith.constant 0 : index
    %c0_0 = arith.constant 0 : index
    %0 = vector.load %arg2[%c0, %c0_0] : memref<16x32xbf16, #tpu.memory_space<vmem>>, vector<16x32xbf16>
    %c0_1 = arith.constant 0 : index
    %c0_2 = arith.constant 0 : index
    %1 = vector.load %arg1[%c0_1, %c0_2] : memref<32x128xbf16, #tpu.memory_space<vmem>>, vector<32x128xbf16>
    %cst = arith.constant dense<0.000000e+00> : vector<16x128xf32>
    %2 = tpu.matmul %0, %1, %cst {dimension_numbers = #tpu.dot_dimension_numbers<[1], [0], [0], [1], [0, 0, 1, 1], [], []>} : vector<16x32xbf16>, vector<32x128xbf16>, vector<16x128xf32> -> vector<16x128xf32>
    %c0_3 = arith.constant 0 : index
    %c0_4 = arith.constant 0 : index
    %3 = vector.load %arg3[%c0_3, %c0_4] : memref<16x1xf32, #tpu.memory_space<vmem>>, vector<16x1xf32>
    %4 = vector.broadcast %3 : vector<16x1xf32> to vector<16x128xf32>
    %5 = arith.addf %2, %4 : vector<16x128xf32>
    %cst_5 = arith.constant 0.000000e+00 : f32
    %6 = vector.broadcast %cst_5 : f32 to vector<16x128xf32>
    %7 = arith.maximumf %5, %6 : vector<16x128xf32>
    %8 = arith.truncf %7 : vector<16x128xf32> to vector<16x128xbf16>
    %c0_6 = arith.constant 0 : index
    %c0_7 = arith.constant 0 : index
    %9 = vector.load %arg6[%c0_6, %c0_7] : memref<16x128xbf16, #tpu.memory_space<vmem>>, vector<16x128xbf16>
    tpu.vector_store %arg6[%c0_6, %c0_7], %8 {strides = array<i32>} : memref<16x128xbf16, #tpu.memory_space<vmem>>, vector<16x128xbf16>,
    %c0_8 = arith.constant 0 : index
    %c0_9 = arith.constant 0 : index
    %10 = vector.load %arg4[%c0_8, %c0_9] : memref<8x16xbf16, #tpu.memory_space<vmem>>, vector<8x16xbf16>
    %cst_10 = arith.constant dense<0.000000e+00> : vector<8x128xf32>
    %11 = tpu.matmul %10, %8, %cst_10 {dimension_numbers = #tpu.dot_dimension_numbers<[1], [0], [0], [1], [0, 0, 1, 1], [], []>} : vector<8x16xbf16>, vector<16x128xbf16>, vector<8x128xf32> -> vector<8x128xf32>
    %c0_11 = arith.constant 0 : index
    %c0_12 = arith.constant 0 : index
    %12 = vector.load %arg5[%c0_11, %c0_12] : memref<8x1xf32, #tpu.memory_space<vmem>>, vector<8x1xf32>
    %13 = vector.broadcast %12 : vector<8x1xf32> to vector<8x128xf32>
    %14 = arith.addf %11, %13 : vector<8x128xf32>
    %cst_13 = arith.constant 0.000000e+00 : f32
    %15 = vector.broadcast %cst_13 : f32 to vector<8x128xf32>
    %16 = arith.maximumf %14, %15 : vector<8x128xf32>
    %17 = arith.truncf %16 : vector<8x128xf32> to vector<8x128xbf16>
    %c0_14 = arith.constant 0 : index
    %c0_15 = arith.constant 0 : index
    %18 = vector.load %arg7[%c0_14, %c0_15] : memref<8x128xbf16, #tpu.memory_space<vmem>>, vector<8x128xbf16>
    tpu.vector_store %arg7[%c0_14, %c0_15], %17 {strides = array<i32>} : memref<8x128xbf16, #tpu.memory_space<vmem>>, vector<8x128xbf16>,
    return
  }
  func.func @transform_0(%arg0: i32) -> (i32, i32) {
    %c0_i32 = arith.constant 0 : i32
    %c0_i32_0 = arith.constant 0 : i32
    return %c0_i32, %arg0 : i32, i32
  }
  func.func @transform_1(%arg0: i32) -> (i32, i32) {
    %c0_i32 = arith.constant 0 : i32
    %c0_i32_0 = arith.constant 0 : i32
    %c0_i32_1 = arith.constant 0 : i32
    return %c0_i32, %c0_i32_0 : i32, i32
  }
  func.func @transform_2(%arg0: i32) -> (i32, i32) {
    %c0_i32 = arith.constant 0 : i32
    %c0_i32_0 = arith.constant 0 : i32
    %c0_i32_1 = arith.constant 0 : i32
    return %c0_i32, %c0_i32_0 : i32, i32
  }
  func.func @transform_3(%arg0: i32) -> (i32, i32) {
    %c0_i32 = arith.constant 0 : i32
    %c0_i32_0 = arith.constant 0 : i32
    %c0_i32_1 = arith.constant 0 : i32
    return %c0_i32, %c0_i32_0 : i32, i32
  }
  func.func @transform_4(%arg0: i32) -> (i32, i32) {
    %c0_i32 = arith.constant 0 : i32
    %c0_i32_0 = arith.constant 0 : i32
    %c0_i32_1 = arith.constant 0 : i32
    return %c0_i32, %c0_i32_0 : i32, i32
  }
  func.func @transform_5(%arg0: i32) -> (i32, i32) {
    %c0_i32 = arith.constant 0 : i32
    %c0_i32_0 = arith.constant 0 : i32
    return %c0_i32, %arg0 : i32, i32
  }
  func.func @transform_6(%arg0: i32) -> (i32, i32) {
    %c0_i32 = arith.constant 0 : i32
    %c0_i32_0 = arith.constant 0 : i32
    return %c0_i32, %arg0 : i32, i32
  }
}

module attributes {stable_mosaic.version = 11 : i64} {
  func.func @_left2_pool_kernel(%arg0: i32, %arg1: memref<9x16x128xbf16, #tpu.memory_space<vmem>>, %arg2: memref<72x128xbf16, #tpu.memory_space<vmem>>, %arg3: memref<16x72xbf16, #tpu.memory_space<vmem>>, %arg4: memref<16x1xf32, #tpu.memory_space<vmem>>, %arg5: memref<32x128xbf16, #tpu.memory_space<vmem>>) attributes {dimension_semantics = [#tpu.dimension_semantics<parallel>], iteration_bounds = array<i64: 1>, scalar_prefetch = 0 : i64, scratch_operands = 0 : i64, tpu.core_type = #tpu.core_type<tc>, window_params = [{transform_indices = @transform_0, window_bounds = array<i64: 9, 16, 128>}, {transform_indices = @transform_1, window_bounds = array<i64: 72, 128>}, {pipeline_mode = #tpu.pipeline_mode<synchronous>, transform_indices = @transform_2, window_bounds = array<i64: 16, 72>}, {pipeline_mode = #tpu.pipeline_mode<synchronous>, transform_indices = @transform_3, window_bounds = array<i64: 16, 1>}, {transform_indices = @transform_4, window_bounds = array<i64: 32, 128>}]} {
    %c0 = arith.constant 0 : index
    %c0_0 = arith.constant 0 : index
    %0 = vector.load %arg3[%c0, %c0_0] : memref<16x72xbf16, #tpu.memory_space<vmem>>, vector<16x72xbf16>
    %c0_1 = arith.constant 0 : index
    %c0_2 = arith.constant 0 : index
    %1 = vector.load %arg2[%c0_1, %c0_2] : memref<72x128xbf16, #tpu.memory_space<vmem>>, vector<72x128xbf16>
    %cst = arith.constant dense<0.000000e+00> : vector<16x128xf32>
    %2 = tpu.matmul %0, %1, %cst {dimension_numbers = #tpu.dot_dimension_numbers<[1], [0], [0], [1], [0, 0, 1, 1], [], []>} : vector<16x72xbf16>, vector<72x128xbf16>, vector<16x128xf32> -> vector<16x128xf32>
    %c0_3 = arith.constant 0 : index
    %c0_4 = arith.constant 0 : index
    %3 = vector.load %arg4[%c0_3, %c0_4] : memref<16x1xf32, #tpu.memory_space<vmem>>, vector<16x1xf32>
    %4 = vector.broadcast %3 : vector<16x1xf32> to vector<16x128xf32>
    %5 = arith.addf %2, %4 : vector<16x128xf32>
    %cst_5 = arith.constant 0.000000e+00 : f32
    %6 = vector.broadcast %cst_5 : f32 to vector<16x128xf32>
    %7 = arith.maximumf %5, %6 : vector<16x128xf32>
    %8 = arith.truncf %7 : vector<16x128xf32> to vector<16x128xbf16>
    %c0_6 = arith.constant 0 : index
    %c0_7 = arith.constant 0 : index
    %9 = vector.load %arg5[%c0_6, %c0_7] : memref<32x128xbf16, #tpu.memory_space<vmem>>, vector<16x128xbf16>
    tpu.vector_store %arg5[%c0_6, %c0_7], %8 {strides = array<i32>} : memref<32x128xbf16, #tpu.memory_space<vmem>>, vector<16x128xbf16>,
    %c0_8 = arith.constant 0 : index
    %c0_9 = arith.constant 0 : index
    %c0_10 = arith.constant 0 : index
    %10 = vector.load %arg1[%c0_8, %c0_9, %c0_10] : memref<9x16x128xbf16, #tpu.memory_space<vmem>>, vector<1x16x128xbf16>
    %11 = vector.shape_cast %10 : vector<1x16x128xbf16> to vector<16x128xbf16>
    %12 = arith.extf %11 : vector<16x128xbf16> to vector<16x128xf32>
    %c1 = arith.constant 1 : index
    %c0_11 = arith.constant 0 : index
    %c0_12 = arith.constant 0 : index
    %13 = vector.load %arg1[%c1, %c0_11, %c0_12] : memref<9x16x128xbf16, #tpu.memory_space<vmem>>, vector<1x16x128xbf16>
    %14 = vector.shape_cast %13 : vector<1x16x128xbf16> to vector<16x128xbf16>
    %15 = arith.extf %14 : vector<16x128xbf16> to vector<16x128xf32>
    %16 = arith.maximumf %12, %15 : vector<16x128xf32>
    %c2 = arith.constant 2 : index
    %c0_13 = arith.constant 0 : index
    %c0_14 = arith.constant 0 : index
    %17 = vector.load %arg1[%c2, %c0_13, %c0_14] : memref<9x16x128xbf16, #tpu.memory_space<vmem>>, vector<1x16x128xbf16>
    %18 = vector.shape_cast %17 : vector<1x16x128xbf16> to vector<16x128xbf16>
    %19 = arith.extf %18 : vector<16x128xbf16> to vector<16x128xf32>
    %20 = arith.maximumf %16, %19 : vector<16x128xf32>
    %c3 = arith.constant 3 : index
    %c0_15 = arith.constant 0 : index
    %c0_16 = arith.constant 0 : index
    %21 = vector.load %arg1[%c3, %c0_15, %c0_16] : memref<9x16x128xbf16, #tpu.memory_space<vmem>>, vector<1x16x128xbf16>
    %22 = vector.shape_cast %21 : vector<1x16x128xbf16> to vector<16x128xbf16>
    %23 = arith.extf %22 : vector<16x128xbf16> to vector<16x128xf32>
    %24 = arith.maximumf %20, %23 : vector<16x128xf32>
    %c4 = arith.constant 4 : index
    %c0_17 = arith.constant 0 : index
    %c0_18 = arith.constant 0 : index
    %25 = vector.load %arg1[%c4, %c0_17, %c0_18] : memref<9x16x128xbf16, #tpu.memory_space<vmem>>, vector<1x16x128xbf16>
    %26 = vector.shape_cast %25 : vector<1x16x128xbf16> to vector<16x128xbf16>
    %27 = arith.extf %26 : vector<16x128xbf16> to vector<16x128xf32>
    %28 = arith.maximumf %24, %27 : vector<16x128xf32>
    %c5 = arith.constant 5 : index
    %c0_19 = arith.constant 0 : index
    %c0_20 = arith.constant 0 : index
    %29 = vector.load %arg1[%c5, %c0_19, %c0_20] : memref<9x16x128xbf16, #tpu.memory_space<vmem>>, vector<1x16x128xbf16>
    %30 = vector.shape_cast %29 : vector<1x16x128xbf16> to vector<16x128xbf16>
    %31 = arith.extf %30 : vector<16x128xbf16> to vector<16x128xf32>
    %32 = arith.maximumf %28, %31 : vector<16x128xf32>
    %c6 = arith.constant 6 : index
    %c0_21 = arith.constant 0 : index
    %c0_22 = arith.constant 0 : index
    %33 = vector.load %arg1[%c6, %c0_21, %c0_22] : memref<9x16x128xbf16, #tpu.memory_space<vmem>>, vector<1x16x128xbf16>
    %34 = vector.shape_cast %33 : vector<1x16x128xbf16> to vector<16x128xbf16>
    %35 = arith.extf %34 : vector<16x128xbf16> to vector<16x128xf32>
    %36 = arith.maximumf %32, %35 : vector<16x128xf32>
    %c7 = arith.constant 7 : index
    %c0_23 = arith.constant 0 : index
    %c0_24 = arith.constant 0 : index
    %37 = vector.load %arg1[%c7, %c0_23, %c0_24] : memref<9x16x128xbf16, #tpu.memory_space<vmem>>, vector<1x16x128xbf16>
    %38 = vector.shape_cast %37 : vector<1x16x128xbf16> to vector<16x128xbf16>
    %39 = arith.extf %38 : vector<16x128xbf16> to vector<16x128xf32>
    %40 = arith.maximumf %36, %39 : vector<16x128xf32>
    %c8 = arith.constant 8 : index
    %c0_25 = arith.constant 0 : index
    %c0_26 = arith.constant 0 : index
    %41 = vector.load %arg1[%c8, %c0_25, %c0_26] : memref<9x16x128xbf16, #tpu.memory_space<vmem>>, vector<1x16x128xbf16>
    %42 = vector.shape_cast %41 : vector<1x16x128xbf16> to vector<16x128xbf16>
    %43 = arith.extf %42 : vector<16x128xbf16> to vector<16x128xf32>
    %44 = arith.maximumf %40, %43 : vector<16x128xf32>
    %45 = arith.truncf %44 : vector<16x128xf32> to vector<16x128xbf16>
    %c16 = arith.constant 16 : index
    %c0_27 = arith.constant 0 : index
    %46 = vector.load %arg5[%c16, %c0_27] : memref<32x128xbf16, #tpu.memory_space<vmem>>, vector<16x128xbf16>
    tpu.vector_store %arg5[%c16, %c0_27], %45 {strides = array<i32>} : memref<32x128xbf16, #tpu.memory_space<vmem>>, vector<16x128xbf16>,
    return
  }
  func.func @transform_0(%arg0: i32) -> (i32, i32, i32) {
    %c0_i32 = arith.constant 0 : i32
    %c0_i32_0 = arith.constant 0 : i32
    %c0_i32_1 = arith.constant 0 : i32
    return %c0_i32, %c0_i32_0, %arg0 : i32, i32, i32
  }
  func.func @transform_1(%arg0: i32) -> (i32, i32) {
    %c0_i32 = arith.constant 0 : i32
    %c0_i32_0 = arith.constant 0 : i32
    return %c0_i32, %arg0 : i32, i32
  }
  func.func @transform_2(%arg0: i32) -> (i32, i32) {
    %c0_i32 = arith.constant 0 : i32
    %c0_i32_0 = arith.constant 0 : i32
    %c0_i32_1 = arith.constant 0 : i32
    return %c0_i32, %c0_i32_0 : i32, i32
  }
  func.func @transform_3(%arg0: i32) -> (i32, i32) {
    %c0_i32 = arith.constant 0 : i32
    %c0_i32_0 = arith.constant 0 : i32
    %c0_i32_1 = arith.constant 0 : i32
    return %c0_i32, %c0_i32_0 : i32, i32
  }
  func.func @transform_4(%arg0: i32) -> (i32, i32) {
    %c0_i32 = arith.constant 0 : i32
    %c0_i32_0 = arith.constant 0 : i32
    return %c0_i32, %arg0 : i32, i32
  }
}

module attributes {stable_mosaic.version = 11 : i64} {
  func.func @_conv_kernel(%arg0: i32, %arg1: memref<288x128xbf16, #tpu.memory_space<vmem>>, %arg2: memref<16x288xbf16, #tpu.memory_space<vmem>>, %arg3: memref<16x1xf32, #tpu.memory_space<vmem>>, %arg4: memref<16x128xf32, #tpu.memory_space<vmem>>) attributes {dimension_semantics = [#tpu.dimension_semantics<parallel>], iteration_bounds = array<i64: 1>, scalar_prefetch = 0 : i64, scratch_operands = 0 : i64, tpu.core_type = #tpu.core_type<tc>, window_params = [{transform_indices = @transform_0, window_bounds = array<i64: 288, 128>}, {pipeline_mode = #tpu.pipeline_mode<synchronous>, transform_indices = @transform_1, window_bounds = array<i64: 16, 288>}, {pipeline_mode = #tpu.pipeline_mode<synchronous>, transform_indices = @transform_2, window_bounds = array<i64: 16, 1>}, {transform_indices = @transform_3, window_bounds = array<i64: 16, 128>}]} {
    %c0 = arith.constant 0 : index
    %c0_0 = arith.constant 0 : index
    %0 = vector.load %arg2[%c0, %c0_0] : memref<16x288xbf16, #tpu.memory_space<vmem>>, vector<16x288xbf16>
    %c0_1 = arith.constant 0 : index
    %c0_2 = arith.constant 0 : index
    %1 = vector.load %arg1[%c0_1, %c0_2] : memref<288x128xbf16, #tpu.memory_space<vmem>>, vector<288x128xbf16>
    %cst = arith.constant dense<0.000000e+00> : vector<16x128xf32>
    %2 = tpu.matmul %0, %1, %cst {dimension_numbers = #tpu.dot_dimension_numbers<[1], [0], [0], [1], [0, 0, 1, 1], [], []>} : vector<16x288xbf16>, vector<288x128xbf16>, vector<16x128xf32> -> vector<16x128xf32>
    %c0_3 = arith.constant 0 : index
    %c0_4 = arith.constant 0 : index
    %3 = vector.load %arg3[%c0_3, %c0_4] : memref<16x1xf32, #tpu.memory_space<vmem>>, vector<16x1xf32>
    %4 = vector.broadcast %3 : vector<16x1xf32> to vector<16x128xf32>
    %5 = arith.addf %2, %4 : vector<16x128xf32>
    %cst_5 = arith.constant 0.000000e+00 : f32
    %6 = vector.broadcast %cst_5 : f32 to vector<16x128xf32>
    %7 = arith.maximumf %5, %6 : vector<16x128xf32>
    %c0_6 = arith.constant 0 : index
    %c0_7 = arith.constant 0 : index
    %8 = vector.load %arg4[%c0_6, %c0_7] : memref<16x128xf32, #tpu.memory_space<vmem>>, vector<16x128xf32>
    tpu.vector_store %arg4[%c0_6, %c0_7], %7 {strides = array<i32>} : memref<16x128xf32, #tpu.memory_space<vmem>>, vector<16x128xf32>,
    return
  }
  func.func @transform_0(%arg0: i32) -> (i32, i32) {
    %c0_i32 = arith.constant 0 : i32
    %c0_i32_0 = arith.constant 0 : i32
    return %c0_i32, %arg0 : i32, i32
  }
  func.func @transform_1(%arg0: i32) -> (i32, i32) {
    %c0_i32 = arith.constant 0 : i32
    %c0_i32_0 = arith.constant 0 : i32
    %c0_i32_1 = arith.constant 0 : i32
    return %c0_i32, %c0_i32_0 : i32, i32
  }
  func.func @transform_2(%arg0: i32) -> (i32, i32) {
    %c0_i32 = arith.constant 0 : i32
    %c0_i32_0 = arith.constant 0 : i32
    %c0_i32_1 = arith.constant 0 : i32
    return %c0_i32, %c0_i32_0 : i32, i32
  }
  func.func @transform_3(%arg0: i32) -> (i32, i32) {
    %c0_i32 = arith.constant 0 : i32
    %c0_i32_0 = arith.constant 0 : i32
    return %c0_i32, %arg0 : i32, i32
  }
}

</mosaic_0001>

<llo_original>
// kernel: stem_block_forward.3
$region0: #{stem_block_forward.3}
  #allocation0 [shape = 'u32[]', space=smem, size = 0x4, offset = 0x4, fixed_abs, tag = 'smem constant byte address 0x4 - core index']
  #allocation1 [shape = 'u32[144,128]{1,0:T(1,128)}', space=vmem, size = 0x12000, scoped, tag = 'internal scratch']
  %s0 = inlined_call_operand.vmem [shape: bf16[32,128], index: 0, kind: input, shape index: {}]
  %s1 = inlined_call_operand.vmem [shape: bf16[16,32], index: 1, kind: input, shape index: {}]
  %s2 = inlined_call_operand.vmem [shape: f32[16,1], index: 2, kind: input, shape index: {}]
  %s3 = inlined_call_operand.vmem [shape: bf16[8,16], index: 3, kind: input, shape index: {}]
  %s4 = inlined_call_operand.vmem [shape: f32[8,1], index: 4, kind: input, shape index: {}]
  %s5 = inlined_call_operand.vmem [shape: bf16[16,128], index: 5, kind: output, shape index: {0}]
  %s6 = inlined_call_operand.vmem [shape: bf16[8,128], index: 6, kind: output, shape index: {1}]
  %7 = xla_tuple %s5, %s6
  %s8 = sld [smem:[#allocation0]]
  $region38: #{stem_block_forward.3} parent=0
    _
  %s10 = ssub.s32 1, %s8
  %s11 = scalar_select 0, %s10, %s8
  // Predicated region
  $region2: #{stem_block_forward.3} parent=0 // pred_check
    _
  $region3: #{stem_block_forward.3} parent=0 // pred_check_branch
    %13 = sbr.rel (0) target = $region5
  $region4: #{stem_block_forward.3} parent=0 // pred_region
    _
  $region5: #{stem_block_forward.3} parent=0 // pred_fallthru
    _
  // Predicated region
  $region6: #{stem_block_forward.3} parent=0 // pred_check
    _
  $region7: #{stem_block_forward.3} parent=0 // pred_check_branch
    %15 = sbr.rel (0) target = $region9
  $region8: #{stem_block_forward.3} parent=0 // pred_region
    _
  $region9: #{stem_block_forward.3} parent=0 // pred_fallthru
    _
  // Predicated region
  $region10: #{stem_block_forward.3} parent=0 // pred_check
    _
  $region11: #{stem_block_forward.3} parent=0 // pred_check_branch
    %17 = sbr.rel (0) target = $region13
  $region12: #{stem_block_forward.3} parent=0 // pred_region
    _
  $region13: #{stem_block_forward.3} parent=0 // pred_fallthru
    _
  // Predicated region
  $region14: #{stem_block_forward.3} parent=0 // pred_check
    _
  $region15: #{stem_block_forward.3} parent=0 // pred_check_branch
    %19 = sbr.rel (0) target = $region17
  $region16: #{stem_block_forward.3} parent=0 // pred_region
    _
  $region17: #{stem_block_forward.3} parent=0 // pred_fallthru
    _
  // Predicated region
  $region18: #{stem_block_forward.3} parent=0 // pred_check
    _
  $region19: #{stem_block_forward.3} parent=0 // pred_check_branch
    %21 = sbr.rel (0) target = $region21
  $region20: #{stem_block_forward.3} parent=0 // pred_region
    _
  $region21: #{stem_block_forward.3} parent=0 // pred_fallthru
    _
  %v23 = vld [vmem:[%s1] sm:$0xf]
  %v24 = vld [vmem:[%s1 + $0x4] sm:$0xf]
  %v25 = vld [vmem:[%s0] sm:$0xf]
  %v26 = vld [vmem:[%s0 + $0x4] sm:$0xf]
  %v27 = vld [vmem:[%s0 + $0x8] sm:$0xf]
  %v28 = vld [vmem:[%s0 + $0xc] sm:$0xf]
  %v29 = vld [vmem:[%s2] sm:$0xff]
  %v30 = vld [vmem:[%s2 + $0x8] sm:$0xff]
  %32 = vset.pattern.permute.xlu0 0
  %33 = vperm.xlu0 %32, %v29
  %v34 = vpop.permute.xlu0 %33
  %37 = vset.pattern.permute.xlu0 0
  %38 = vperm.xlu0 %37, %v30
  %v39 = vpop.permute.xlu0 %38
  %v43 = vunpack.c.l.b16 %v23
  %v44 = vunpack.c.l.b16 %v24
  %v45 = vpack.c.b16 %v44, %v43
  %v50 = vunpack.c.l.b16 %v25
  %v51 = vunpack.c.l.b16 %v26
  %v52 = vunpack.c.l.b16 %v27
  %v53 = vunpack.c.l.b16 %v28
  %v54 = vpack.c.b16 %v51, %v50
  %v55 = vpack.c.b16 %v53, %v52
  %vm58 = vcmask 261120
  %v60 = vsel %vm58, %v45, 0
  %62 = vmatprep.subr.bf16.mxu0 0
  %63 = vmatpush1.bf16.msra.mxu0 %v54
  %64 = vmatprep.subr.bf16.mxu0 0
  %65 = vmatpush1.bf16.msra.mxu0 %v55
  %66 = vmatprep.subr.bf16.mxu0 0
  %67 = vmatpush1.bf16.msra.mxu0 0
  %68 = vmatprep.subr.bf16.mxu0 0
  %69 = vmatpush1.bf16.msra.mxu0 0
  %70 = vmatprep.subr.bf16.mxu0 0
  %71 = vmatpush1.bf16.msra.mxu0 0
  %72 = vmatprep.subr.bf16.mxu0 0
  %73 = vmatpush1.bf16.msra.mxu0 0
  %74 = vmatprep.subr.bf16.mxu0 0
  %75 = vmatpush1.bf16.msra.mxu0 0
  %76 = vmatprep.subr.bf16.mxu0 0
  %77 = vmatpush1.bf16.msra.mxu0 0
  %78 = vmatprep.subr.bf16.mxu0 0
  %79 = vmatpush1.bf16.msra.mxu0 0
  %80 = vmatprep.subr.bf16.mxu0 0
  %81 = vmatpush1.bf16.msra.mxu0 0
  %82 = vmatprep.subr.bf16.mxu0 0
  %83 = vmatpush1.bf16.msra.mxu0 0
  %84 = vmatprep.subr.bf16.mxu0 0
  %85 = vmatpush1.bf16.msra.mxu0 0
  %86 = vmatprep.subr.bf16.mxu0 0
  %87 = vmatpush1.bf16.msra.mxu0 0
  %88 = vmatprep.subr.bf16.mxu0 0
  %89 = vmatpush1.bf16.msra.mxu0 0
  %90 = vmatprep.subr.bf16.mxu0 0
  %91 = vmatpush1.bf16.msra.mxu0 0
  %92 = vmatprep.subr.bf16.mxu0 0
  %93 = vmatpush1.bf16.msra.mxu0 0
  %94 = vmatprep.mubr.bf16.mxu0 0
  %95 = vmatmul.mubr.bf16.gmra.mrb[0].mxu0 %v60
  %v96 = vpop.f32.mrb[0].mxu0
  %v97 = vadd.f32 %v34, %v96
  %v98 = vpop.f32.mrb[0].mxu0
  %v99 = vpop.f32.mrb[0].mxu0
  %v100 = vadd.f32 %v39, %v99
  %v101 = vpop.f32.mrb[0].mxu0
  %102 = vdwg.mxu0
  %v103 = vmax.f32 %v97, 0.0
  %v104 = vmax.f32 %v100, 0.0
  %v105 = vpack.c.bf16 %v104, %v103
  %v107 = vunpack.c.l.b16 %v105
  %v108 = vunpack.c.h.b16 %v105
  %v109 = vpack.c.b16 %v107, %v107
  %v110 = vpack.c.b16 %v108, %v108
  %113 = vst [vmem:[%s5] sm:$0xf] %v109
  %114 = vst [vmem:[%s5 + $0x4] sm:$0xf] %v110
  %v115 = vld [vmem:[%s3] sm:$0xf]
  %v116 = vld [vmem:[%s4] sm:$0xff]
  %118 = vset.pattern.permute.xlu0 0
  %119 = vperm.xlu0 %118, %v116
  %v120 = vpop.permute.xlu0 %119
  %vm122 = vcmask 130048
  %v124 = vsel %vm122, %v115, 0
  %126 = vmatprep.subr.bf16.mxu0 0
  %127 = vmatpush1.bf16.msra.mxu0 %v105
  %128 = vmatprep.subr.bf16.mxu0 0
  %129 = vmatpush1.bf16.msra.mxu0 0
  %130 = vmatprep.subr.bf16.mxu0 0
  %131 = vmatpush1.bf16.msra.mxu0 0
  %132 = vmatprep.subr.bf16.mxu0 0
  %133 = vmatpush1.bf16.msra.mxu0 0
  %134 = vmatprep.subr.bf16.mxu0 0
  %135 = vmatpush1.bf16.msra.mxu0 0
  %136 = vmatprep.subr.bf16.mxu0 0
  %137 = vmatpush1.bf16.msra.mxu0 0
  %138 = vmatprep.subr.bf16.mxu0 0
  %139 = vmatpush1.bf16.msra.mxu0 0
  %140 = vmatprep.subr.bf16.mxu0 0
  %141 = vmatpush1.bf16.msra.mxu0 0
  %142 = vmatprep.subr.bf16.mxu0 0
  %143 = vmatpush1.bf16.msra.mxu0 0
  %144 = vmatprep.subr.bf16.mxu0 0
  %145 = vmatpush1.bf16.msra.mxu0 0
  %146 = vmatprep.subr.bf16.mxu0 0
  %147 = vmatpush1.bf16.msra.mxu0 0
  %148 = vmatprep.subr.bf16.mxu0 0
  %149 = vmatpush1.bf16.msra.mxu0 0
  %150 = vmatprep.subr.bf16.mxu0 0
  %151 = vmatpush1.bf16.msra.mxu0 0
  %152 = vmatprep.subr.bf16.mxu0 0
  %153 = vmatpush1.bf16.msra.mxu0 0
  %154 = vmatprep.subr.bf16.mxu0 0
  %155 = vmatpush1.bf16.msra.mxu0 0
  %156 = vmatprep.subr.bf16.mxu0 0
  %157 = vmatpush1.bf16.msra.mxu0 0
  %158 = vmatprep.mubr.bf16.mxu0 0
  %159 = vmatmul.mubr.bf16.gmra.mrb[0].mxu0 %v124
  %v160 = vpop.f32.mrb[0].mxu0
  %v161 = vadd.f32 %v120, %v160
  %v162 = vpop.f32.mrb[0].mxu0
  %v163 = vpop.f32.mrb[0].mxu0
  %v164 = vpop.f32.mrb[0].mxu0
  %165 = vdwg.mxu0
  %v166 = vmax.f32 %v161, 0.0
  %v167 = vpack.c.bf16 %v166, %v166
  %168 = vst [vmem:[%s6] sm:$0xf] %v167
  // Predicated region
  $region22: #{stem_block_forward.3} parent=0 // pred_check
    _
  $region23: #{stem_block_forward.3} parent=0 // pred_check_branch
    %170 = sbr.rel (0) target = $region25
  $region24: #{stem_block_forward.3} parent=0 // pred_region
    _
  $region25: #{stem_block_forward.3} parent=0 // pred_fallthru
    _
  // Predicated region
  $region26: #{stem_block_forward.3} parent=0 // pred_check
    _
  $region27: #{stem_block_forward.3} parent=0 // pred_check_branch
    %172 = sbr.rel (0) target = $region29
  $region28: #{stem_block_forward.3} parent=0 // pred_region
    _
  $region29: #{stem_block_forward.3} parent=0 // pred_fallthru
    _
  // Predicated region
  $region30: #{stem_block_forward.3} parent=0 // pred_check
    _
  $region31: #{stem_block_forward.3} parent=0 // pred_check_branch
    %174 = sbr.rel (0) target = $region33
  $region32: #{stem_block_forward.3} parent=0 // pred_region
    _
  $region33: #{stem_block_forward.3} parent=0 // pred_fallthru
    _
  // Predicated region
  $region34: #{stem_block_forward.3} parent=0 // pred_check
    _
  $region35: #{stem_block_forward.3} parent=0 // pred_check_branch
    %176 = sbr.rel (0) target = $region37
  $region36: #{stem_block_forward.3} parent=0 // pred_region
    _
  $region37: #{stem_block_forward.3} parent=0 // pred_fallthru
    _

// kernel: stem_block_forward.4
$region0: #{stem_block_forward.4}
  #allocation0 [shape = 'u32[]', space=smem, size = 0x4, offset = 0x4, fixed_abs, tag = 'smem constant byte address 0x4 - core index']
  #allocation1 [shape = 'u32[144,128]{1,0:T(1,128)}', space=vmem, size = 0x12000, scoped, tag = 'internal scratch']
  %s0 = inlined_call_operand.vmem [shape: bf16[9,16,128], index: 0, kind: input, shape index: {}]
  %s1 = inlined_call_operand.vmem [shape: bf16[72,128], index: 1, kind: input, shape index: {}]
  %s2 = inlined_call_operand.vmem [shape: bf16[16,72], index: 2, kind: input, shape index: {}]
  %s3 = inlined_call_operand.vmem [shape: f32[16,1], index: 3, kind: input, shape index: {}]
  %s4 = inlined_call_operand.vmem [shape: bf16[32,128], index: 4, kind: output, shape index: {}]
  %s5 = sld [smem:[#allocation0]]
  $region26: #{stem_block_forward.4} parent=0
    _
  %s7 = ssub.s32 1, %s5
  %s8 = scalar_select 0, %s7, %s5
  // Predicated region
  $region2: #{stem_block_forward.4} parent=0 // pred_check
    _
  $region3: #{stem_block_forward.4} parent=0 // pred_check_branch
    %10 = sbr.rel (0) target = $region5
  $region4: #{stem_block_forward.4} parent=0 // pred_region
    _
  $region5: #{stem_block_forward.4} parent=0 // pred_fallthru
    _
  // Predicated region
  $region6: #{stem_block_forward.4} parent=0 // pred_check
    _
  $region7: #{stem_block_forward.4} parent=0 // pred_check_branch
    %12 = sbr.rel (0) target = $region9
  $region8: #{stem_block_forward.4} parent=0 // pred_region
    _
  $region9: #{stem_block_forward.4} parent=0 // pred_fallthru
    _
  // Predicated region
  $region10: #{stem_block_forward.4} parent=0 // pred_check
    _
  $region11: #{stem_block_forward.4} parent=0 // pred_check_branch
    %14 = sbr.rel (0) target = $region13
  $region12: #{stem_block_forward.4} parent=0 // pred_region
    _
  $region13: #{stem_block_forward.4} parent=0 // pred_fallthru
    _
  // Predicated region
  $region14: #{stem_block_forward.4} parent=0 // pred_check
    _
  $region15: #{stem_block_forward.4} parent=0 // pred_check_branch
    %16 = sbr.rel (0) target = $region17
  $region16: #{stem_block_forward.4} parent=0 // pred_region
    _
  $region17: #{stem_block_forward.4} parent=0 // pred_fallthru
    _
  %v18 = vld [vmem:[%s2] sm:$0xf]
  %v19 = vld [vmem:[%s2 + $0x4] sm:$0xf]
  %v20 = vld [vmem:[%s1] sm:$0xf]
  %v21 = vld [vmem:[%s1 + $0x4] sm:$0xf]
  %v22 = vld [vmem:[%s1 + $0x8] sm:$0xf]
  %v23 = vld [vmem:[%s1 + $0xc] sm:$0xf]
  %v24 = vld [vmem:[%s1 + $0x10] sm:$0xf]
  %v25 = vld [vmem:[%s1 + $0x14] sm:$0xf]
  %v26 = vld [vmem:[%s1 + $0x18] sm:$0xf]
  %v27 = vld [vmem:[%s1 + $0x1c] sm:$0xf]
  %v28 = vld [vmem:[%s1 + $0x20] sm:$0xf]
  %v29 = vld [vmem:[%s3] sm:$0xff]
  %v30 = vld [vmem:[%s3 + $0x8] sm:$0xff]
  %32 = vset.pattern.permute.xlu0 0
  %33 = vperm.xlu0 %32, %v29
  %v34 = vpop.permute.xlu0 %33
  %37 = vset.pattern.permute.xlu0 0
  %38 = vperm.xlu0 %37, %v30
  %v39 = vpop.permute.xlu0 %38
  %v43 = vunpack.c.l.b16 %v18
  %v44 = vunpack.c.l.b16 %v19
  %v45 = vpack.c.b16 %v44, %v43
  %v55 = vunpack.c.l.b16 %v20
  %v56 = vunpack.c.l.b16 %v21
  %v57 = vunpack.c.l.b16 %v22
  %v58 = vunpack.c.l.b16 %v23
  %v59 = vunpack.c.l.b16 %v24
  %v60 = vunpack.c.l.b16 %v25
  %v61 = vunpack.c.l.b16 %v26
  %v62 = vunpack.c.l.b16 %v27
  %v63 = vunpack.c.l.b16 %v28
  %v64 = vpack.c.b16 %v56, %v55
  %v65 = vpack.c.b16 %v58, %v57
  %v66 = vpack.c.b16 %v60, %v59
  %v67 = vpack.c.b16 %v62, %v61
  %v68 = vpack.c.b16 %v63, %v63
  %vm73 = vcmask 588800
  %v75 = vsel %vm73, %v45, 0
  %vm77 = vcmask 1043456
  %v79 = vsel %vm77, %v68, 0
  %81 = vmatprep.subr.bf16.mxu0 0
  %82 = vmatpush1.bf16.msra.mxu0 %v64
  %83 = vmatprep.subr.bf16.mxu0 0
  %84 = vmatpush1.bf16.msra.mxu0 %v65
  %85 = vmatprep.subr.bf16.mxu0 0
  %86 = vmatpush1.bf16.msra.mxu0 %v66
  %87 = vmatprep.subr.bf16.mxu0 0
  %88 = vmatpush1.bf16.msra.mxu0 %v67
  %89 = vmatprep.subr.bf16.mxu0 0
  %90 = vmatpush1.bf16.msra.mxu0 %v79
  %91 = vmatprep.subr.bf16.mxu0 0
  %92 = vmatpush1.bf16.msra.mxu0 0
  %93 = vmatprep.subr.bf16.mxu0 0
  %94 = vmatpush1.bf16.msra.mxu0 0
  %95 = vmatprep.subr.bf16.mxu0 0
  %96 = vmatpush1.bf16.msra.mxu0 0
  %97 = vmatprep.subr.bf16.mxu0 0
  %98 = vmatpush1.bf16.msra.mxu0 0
  %99 = vmatprep.subr.bf16.mxu0 0
  %100 = vmatpush1.bf16.msra.mxu0 0
  %101 = vmatprep.subr.bf16.mxu0 0
  %102 = vmatpush1.bf16.msra.mxu0 0
  %103 = vmatprep.subr.bf16.mxu0 0
  %104 = vmatpush1.bf16.msra.mxu0 0
  %105 = vmatprep.subr.bf16.mxu0 0
  %106 = vmatpush1.bf16.msra.mxu0 0
  %107 = vmatprep.subr.bf16.mxu0 0
  %108 = vmatpush1.bf16.msra.mxu0 0
  %109 = vmatprep.subr.bf16.mxu0 0
  %110 = vmatpush1.bf16.msra.mxu0 0
  %111 = vmatprep.subr.bf16.mxu0 0
  %112 = vmatpush1.bf16.msra.mxu0 0
  %113 = vmatprep.mubr.bf16.mxu0 0
  %114 = vmatmul.mubr.bf16.gmra.mrb[0].mxu0 %v75
  %v115 = vpop.f32.mrb[0].mxu0
  %v116 = vadd.f32 %v34, %v115
  %v117 = vpop.f32.mrb[0].mxu0
  %v118 = vpop.f32.mrb[0].mxu0
  %v119 = vadd.f32 %v39, %v118
  %v120 = vpop.f32.mrb[0].mxu0
  %121 = vdwg.mxu0
  %v122 = vmax.f32 %v116, 0.0
  %v123 = vmax.f32 %v119, 0.0
  %v124 = vpack.c.bf16 %v123, %v122
  %v126 = vunpack.c.l.b16 %v124
  %v127 = vunpack.c.h.b16 %v124
  %v128 = vpack.c.b16 %v126, %v126
  %v129 = vpack.c.b16 %v127, %v127
  %132 = vst [vmem:[%s4] sm:$0xf] %v128
  %133 = vst [vmem:[%s4 + $0x4] sm:$0xf] %v129
  %v134 = vld [vmem:[%s0] sm:$0xf]
  %v135 = vld [vmem:[%s0 + $0x4] sm:$0xf]
  %v136 = vunpack.c.l.bf16 %v134
  %v137 = vunpack.c.l.bf16 %v135
  %s138 = scalar_lea.vmem %s0, 8
  %v139 = vld [vmem:[%s138] sm:$0xf]
  %v140 = vld [vmem:[%s138 + $0x4] sm:$0xf]
  %v141 = vunpack.c.l.bf16 %v139
  %v142 = vunpack.c.l.bf16 %v140
  %v143 = vmax.f32 %v136, %v141
  %v144 = vmax.f32 %v137, %v142
  %s145 = scalar_lea.vmem %s0, 16
  %v146 = vld [vmem:[%s145] sm:$0xf]
  %v147 = vld [vmem:[%s145 + $0x4] sm:$0xf]
  %v148 = vunpack.c.l.bf16 %v146
  %v149 = vunpack.c.l.bf16 %v147
  %v150 = vmax.f32 %v143, %v148
  %v151 = vmax.f32 %v144, %v149
  %s152 = scalar_lea.vmem %s0, 24
  %v153 = vld [vmem:[%s152] sm:$0xf]
  %v154 = vld [vmem:[%s152 + $0x4] sm:$0xf]
  %v155 = vunpack.c.l.bf16 %v153
  %v156 = vunpack.c.l.bf16 %v154
  %v157 = vmax.f32 %v150, %v155
  %v158 = vmax.f32 %v151, %v156
  %s159 = scalar_lea.vmem %s0, 32
  %v160 = vld [vmem:[%s159] sm:$0xf]
  %v161 = vld [vmem:[%s159 + $0x4] sm:$0xf]
  %v162 = vunpack.c.l.bf16 %v160
  %v163 = vunpack.c.l.bf16 %v161
  %v164 = vmax.f32 %v157, %v162
  %v165 = vmax.f32 %v158, %v163
  %s166 = scalar_lea.vmem %s0, 40
  %v167 = vld [vmem:[%s166] sm:$0xf]
  %v168 = vld [vmem:[%s166 + $0x4] sm:$0xf]
  %v169 = vunpack.c.l.bf16 %v167
  %v170 = vunpack.c.l.bf16 %v168
  %v171 = vmax.f32 %v164, %v169
  %v172 = vmax.f32 %v165, %v170
  %s173 = scalar_lea.vmem %s0, 48
  %v174 = vld [vmem:[%s173] sm:$0xf]
  %v175 = vld [vmem:[%s173 + $0x4] sm:$0xf]
  %v176 = vunpack.c.l.bf16 %v174
  %v177 = vunpack.c.l.bf16 %v175
  %v178 = vmax.f32 %v171, %v176
  %v179 = vmax.f32 %v172, %v177
  %s180 = scalar_lea.vmem %s0, 56
  %v181 = vld [vmem:[%s180] sm:$0xf]
  %v182 = vld [vmem:[%s180 + $0x4] sm:$0xf]
  %v183 = vunpack.c.l.bf16 %v181
  %v184 = vunpack.c.l.bf16 %v182
  %v185 = vmax.f32 %v178, %v183
  %v186 = vmax.f32 %v179, %v184
  %s187 = scalar_lea.vmem %s0, 64
  %v188 = vld [vmem:[%s187] sm:$0xf]
  %v189 = vld [vmem:[%s187 + $0x4] sm:$0xf]
  %v190 = vunpack.c.l.bf16 %v188
  %v191 = vunpack.c.l.bf16 %v189
  %v192 = vmax.f32 %v185, %v190
  %v193 = vmax.f32 %v186, %v191
  %v194 = vpack.c.bf16 %v193, %v192
  %v196 = vunpack.c.l.b16 %v194
  %v197 = vunpack.c.h.b16 %v194
  %v198 = vpack.c.b16 %v196, %v196
  %v199 = vpack.c.b16 %v197, %v197
  %202 = vst [vmem:[%s4 + $0x8] sm:$0xf] %v198
  %203 = vst [vmem:[%s4 + $0xc] sm:$0xf] %v199
  // Predicated region
  $region18: #{stem_block_forward.4} parent=0 // pred_check
    _
  $region19: #{stem_block_forward.4} parent=0 // pred_check_branch
    %205 = sbr.rel (0) target = $region21
  $region20: #{stem_block_forward.4} parent=0 // pred_region
    _
  $region21: #{stem_block_forward.4} parent=0 // pred_fallthru
    _
  // Predicated region
  $region22: #{stem_block_forward.4} parent=0 // pred_check
    _
  $region23: #{stem_block_forward.4} parent=0 // pred_check_branch
    %207 = sbr.rel (0) target = $region25
  $region24: #{stem_block_forward.4} parent=0 // pred_region
    _
  $region25: #{stem_block_forward.4} parent=0 // pred_fallthru
    _

// kernel: stem_block_forward.5
$region0: #{stem_block_forward.5}
  #allocation0 [shape = 'u32[]', space=smem, size = 0x4, offset = 0x4, fixed_abs, tag = 'smem constant byte address 0x4 - core index']
  #allocation1 [shape = 'u32[144,128]{1,0:T(1,128)}', space=vmem, size = 0x12000, scoped, tag = 'internal scratch']
  %s0 = inlined_call_operand.vmem [shape: bf16[288,128], index: 0, kind: input, shape index: {}]
  %s1 = inlined_call_operand.vmem [shape: bf16[16,288], index: 1, kind: input, shape index: {}]
  %s2 = inlined_call_operand.vmem [shape: f32[16,1], index: 2, kind: input, shape index: {}]
  %s3 = inlined_call_operand.vmem [shape: f32[16,128], index: 3, kind: output, shape index: {}]
  %s4 = sld [smem:[#allocation0]]
  $region22: #{stem_block_forward.5} parent=0
    _
  %s6 = ssub.s32 1, %s4
  %s7 = scalar_select 0, %s6, %s4
  // Predicated region
  $region2: #{stem_block_forward.5} parent=0 // pred_check
    _
  $region3: #{stem_block_forward.5} parent=0 // pred_check_branch
    %9 = sbr.rel (0) target = $region5
  $region4: #{stem_block_forward.5} parent=0 // pred_region
    _
  $region5: #{stem_block_forward.5} parent=0 // pred_fallthru
    _
  // Predicated region
  $region6: #{stem_block_forward.5} parent=0 // pred_check
    _
  $region7: #{stem_block_forward.5} parent=0 // pred_check_branch
    %11 = sbr.rel (0) target = $region9
  $region8: #{stem_block_forward.5} parent=0 // pred_region
    _
  $region9: #{stem_block_forward.5} parent=0 // pred_fallthru
    _
  // Predicated region
  $region10: #{stem_block_forward.5} parent=0 // pred_check
    _
  $region11: #{stem_block_forward.5} parent=0 // pred_check_branch
    %13 = sbr.rel (0) target = $region13
  $region12: #{stem_block_forward.5} parent=0 // pred_region
    _
  $region13: #{stem_block_forward.5} parent=0 // pred_fallthru
    _
  %v15 = vld [vmem:[%s1] sm:$0xff]
  %v16 = vld [vmem:[%s1 + $0x8] sm:$0xf]
  %v17 = vld [vmem:[%s1 + $0xc] sm:$0xff]
  %v18 = vld [vmem:[%s1 + $0x14] sm:$0xf]
  %v19 = vld [vmem:[%s0] sm:$0xf]
  %v20 = vld [vmem:[%s0 + $0x4] sm:$0xf]
  %v21 = vld [vmem:[%s0 + $0x8] sm:$0xf]
  %v22 = vld [vmem:[%s0 + $0xc] sm:$0xf]
  %v23 = vld [vmem:[%s0 + $0x10] sm:$0xf]
  %v24 = vld [vmem:[%s0 + $0x14] sm:$0xf]
  %v25 = vld [vmem:[%s0 + $0x18] sm:$0xf]
  %v26 = vld [vmem:[%s0 + $0x1c] sm:$0xf]
  %v27 = vld [vmem:[%s0 + $0x20] sm:$0xf]
  %v28 = vld [vmem:[%s0 + $0x24] sm:$0xf]
  %v29 = vld [vmem:[%s0 + $0x28] sm:$0xf]
  %v30 = vld [vmem:[%s0 + $0x2c] sm:$0xf]
  %v31 = vld [vmem:[%s0 + $0x30] sm:$0xf]
  %v32 = vld [vmem:[%s0 + $0x34] sm:$0xf]
  %v33 = vld [vmem:[%s0 + $0x38] sm:$0xf]
  %v34 = vld [vmem:[%s0 + $0x3c] sm:$0xf]
  %v35 = vld [vmem:[%s0 + $0x40] sm:$0xf]
  %v36 = vld [vmem:[%s0 + $0x44] sm:$0xf]
  %v37 = vld [vmem:[%s0 + $0x48] sm:$0xf]
  %v38 = vld [vmem:[%s0 + $0x4c] sm:$0xf]
  %v39 = vld [vmem:[%s0 + $0x50] sm:$0xf]
  %v40 = vld [vmem:[%s0 + $0x54] sm:$0xf]
  %v41 = vld [vmem:[%s0 + $0x58] sm:$0xf]
  %v42 = vld [vmem:[%s0 + $0x5c] sm:$0xf]
  %v43 = vld [vmem:[%s0 + $0x60] sm:$0xf]
  %v44 = vld [vmem:[%s0 + $0x64] sm:$0xf]
  %v45 = vld [vmem:[%s0 + $0x68] sm:$0xf]
  %v46 = vld [vmem:[%s0 + $0x6c] sm:$0xf]
  %v47 = vld [vmem:[%s0 + $0x70] sm:$0xf]
  %v48 = vld [vmem:[%s0 + $0x74] sm:$0xf]
  %v49 = vld [vmem:[%s0 + $0x78] sm:$0xf]
  %v50 = vld [vmem:[%s0 + $0x7c] sm:$0xf]
  %v51 = vld [vmem:[%s0 + $0x80] sm:$0xf]
  %v52 = vld [vmem:[%s0 + $0x84] sm:$0xf]
  %v53 = vld [vmem:[%s0 + $0x88] sm:$0xf]
  %v54 = vld [vmem:[%s0 + $0x8c] sm:$0xf]
  %v55 = vld [vmem:[%s2] sm:$0xff]
  %v56 = vld [vmem:[%s2 + $0x8] sm:$0xff]
  %58 = vset.pattern.permute.xlu0 0
  %59 = vperm.xlu0 %58, %v55
  %v60 = vpop.permute.xlu0 %59
  %63 = vset.pattern.permute.xlu0 0
  %64 = vperm.xlu0 %63, %v56
  %v65 = vpop.permute.xlu0 %64
  %v71 = vunpack.c.l.b16 %v15
  %v72 = vunpack.c.h.b16 %v15
  %v73 = vunpack.c.l.b16 %v16
  %v74 = vunpack.c.l.b16 %v17
  %v75 = vunpack.c.h.b16 %v17
  %v76 = vunpack.c.l.b16 %v18
  %v77 = vpack.c.b16 %v74, %v71
  %v78 = vpack.c.b16 %v75, %v72
  %v79 = vpack.c.b16 %v76, %v73
  %v118 = vunpack.c.l.b16 %v19
  %v119 = vunpack.c.l.b16 %v20
  %v120 = vunpack.c.l.b16 %v21
  %v121 = vunpack.c.l.b16 %v22
  %v122 = vunpack.c.l.b16 %v23
  %v123 = vunpack.c.l.b16 %v24
  %v124 = vunpack.c.l.b16 %v25
  %v125 = vunpack.c.l.b16 %v26
  %v126 = vunpack.c.l.b16 %v27
  %v127 = vunpack.c.l.b16 %v28
  %v128 = vunpack.c.l.b16 %v29
  %v129 = vunpack.c.l.b16 %v30
  %v130 = vunpack.c.l.b16 %v31
  %v131 = vunpack.c.l.b16 %v32
  %v132 = vunpack.c.l.b16 %v33
  %v133 = vunpack.c.l.b16 %v34
  %v134 = vunpack.c.l.b16 %v35
  %v135 = vunpack.c.l.b16 %v36
  %v136 = vunpack.c.l.b16 %v37
  %v137 = vunpack.c.l.b16 %v38
  %v138 = vunpack.c.l.b16 %v39
  %v139 = vunpack.c.l.b16 %v40
  %v140 = vunpack.c.l.b16 %v41
  %v141 = vunpack.c.l.b16 %v42
  %v142 = vunpack.c.l.b16 %v43
  %v143 = vunpack.c.l.b16 %v44
  %v144 = vunpack.c.l.b16 %v45
  %v145 = vunpack.c.l.b16 %v46
  %v146 = vunpack.c.l.b16 %v47
  %v147 = vunpack.c.l.b16 %v48
  %v148 = vunpack.c.l.b16 %v49
  %v149 = vunpack.c.l.b16 %v50
  %v150 = vunpack.c.l.b16 %v51
  %v151 = vunpack.c.l.b16 %v52
  %v152 = vunpack.c.l.b16 %v53
  %v153 = vunpack.c.l.b16 %v54
  %v154 = vpack.c.b16 %v119, %v118
  %v155 = vpack.c.b16 %v121, %v120
  %v156 = vpack.c.b16 %v123, %v122
  %v157 = vpack.c.b16 %v125, %v124
  %v158 = vpack.c.b16 %v127, %v126
  %v159 = vpack.c.b16 %v129, %v128
  %v160 = vpack.c.b16 %v131, %v130
  %v161 = vpack.c.b16 %v133, %v132
  %v162 = vpack.c.b16 %v135, %v134
  %v163 = vpack.c.b16 %v137, %v136
  %v164 = vpack.c.b16 %v139, %v138
  %v165 = vpack.c.b16 %v141, %v140
  %v166 = vpack.c.b16 %v143, %v142
  %v167 = vpack.c.b16 %v145, %v144
  %v168 = vpack.c.b16 %v147, %v146
  %v169 = vpack.c.b16 %v149, %v148
  %v170 = vpack.c.b16 %v151, %v150
  %v171 = vpack.c.b16 %v153, %v152
  %vm190 = vcmask 261120
  %v192 = vsel %vm190, %v79, 0
  %194 = vmatprep.subr.bf16.mxu0 0
  %195 = vmatpush1.bf16.msra.mxu0 %v154
  %196 = vmatprep.subr.bf16.mxu0 0
  %197 = vmatpush1.bf16.msra.mxu0 %v155
  %198 = vmatprep.subr.bf16.mxu0 0
  %199 = vmatpush1.bf16.msra.mxu0 %v156
  %200 = vmatprep.subr.bf16.mxu0 0
  %201 = vmatpush1.bf16.msra.mxu0 %v157
  %202 = vmatprep.subr.bf16.mxu0 0
  %203 = vmatpush1.bf16.msra.mxu0 %v158
  %204 = vmatprep.subr.bf16.mxu0 0
  %205 = vmatpush1.bf16.msra.mxu0 %v159
  %206 = vmatprep.subr.bf16.mxu0 0
  %207 = vmatpush1.bf16.msra.mxu0 %v160
  %208 = vmatprep.subr.bf16.mxu0 0
  %209 = vmatpush1.bf16.msra.mxu0 %v161
  %210 = vmatprep.subr.bf16.mxu0 0
  %211 = vmatpush1.bf16.msra.mxu0 %v162
  %212 = vmatprep.subr.bf16.mxu0 0
  %213 = vmatpush1.bf16.msra.mxu0 %v163
  %214 = vmatprep.subr.bf16.mxu0 0
  %215 = vmatpush1.bf16.msra.mxu0 %v164
  %216 = vmatprep.subr.bf16.mxu0 0
  %217 = vmatpush1.bf16.msra.mxu0 %v165
  %218 = vmatprep.subr.bf16.mxu0 0
  %219 = vmatpush1.bf16.msra.mxu0 %v166
  %220 = vmatprep.subr.bf16.mxu0 0
  %221 = vmatpush1.bf16.msra.mxu0 %v167
  %222 = vmatprep.subr.bf16.mxu0 0
  %223 = vmatpush1.bf16.msra.mxu0 %v168
  %224 = vmatprep.subr.bf16.mxu0 0
  %225 = vmatpush1.bf16.msra.mxu0 %v169
  %226 = vmatprep.mubr.bf16.mxu0 %v78
  %227 = vmatmul.mubr.bf16.gmra.mrb[0].mxu0 %v77
  %v228 = vpop.f32.mrb[0].mxu0
  %v229 = vadd.f32 %v60, %v228
  %v230 = vpop.f32.mrb[0].mxu0
  %v231 = vpop.f32.mrb[0].mxu0
  %v232 = vadd.f32 %v65, %v231
  %v233 = vpop.f32.mrb[0].mxu0
  %234 = vdwg.mxu0
  %235 = vmatprep.subr.bf16.mxu0 0
  %236 = vmatpush1.bf16.msra.mxu0 %v170
  %237 = vmatprep.subr.bf16.mxu0 0
  %238 = vmatpush1.bf16.msra.mxu0 %v171
  %239 = vmatprep.subr.bf16.mxu0 0
  %240 = vmatpush1.bf16.msra.mxu0 0
  %241 = vmatprep.subr.bf16.mxu0 0
  %242 = vmatpush1.bf16.msra.mxu0 0
  %243 = vmatprep.subr.bf16.mxu0 0
  %244 = vmatpush1.bf16.msra.mxu0 0
  %245 = vmatprep.subr.bf16.mxu0 0
  %246 = vmatpush1.bf16.msra.mxu0 0
  %247 = vmatprep.subr.bf16.mxu0 0
  %248 = vmatpush1.bf16.msra.mxu0 0
  %249 = vmatprep.subr.bf16.mxu0 0
  %250 = vmatpush1.bf16.msra.mxu0 0
  %251 = vmatprep.subr.bf16.mxu0 0
  %252 = vmatpush1.bf16.msra.mxu0 0
  %253 = vmatprep.subr.bf16.mxu0 0
  %254 = vmatpush1.bf16.msra.mxu0 0
  %255 = vmatprep.subr.bf16.mxu0 0
  %256 = vmatpush1.bf16.msra.mxu0 0
  %257 = vmatprep.subr.bf16.mxu0 0
  %258 = vmatpush1.bf16.msra.mxu0 0
  %259 = vmatprep.subr.bf16.mxu0 0
  %260 = vmatpush1.bf16.msra.mxu0 0
  %261 = vmatprep.subr.bf16.mxu0 0
  %262 = vmatpush1.bf16.msra.mxu0 0
  %263 = vmatprep.subr.bf16.mxu0 0
  %264 = vmatpush1.bf16.msra.mxu0 0
  %265 = vmatprep.subr.bf16.mxu0 0
  %266 = vmatpush1.bf16.msra.mxu0 0
  %267 = vmatprep.mubr.bf16.mxu0 0
  %268 = vmatmul.mubr.bf16.gmra.mrb[0].mxu0 %v192
  %v269 = vpop.f32.mrb[0].mxu0
  %v270 = vadd.f32 %v229, %v269
  %v271 = vpop.f32.mrb[0].mxu0
  %v272 = vpop.f32.mrb[0].mxu0
  %v273 = vadd.f32 %v232, %v272
  %v274 = vpop.f32.mrb[0].mxu0
  %275 = vdwg.mxu0
  %v276 = vmax.f32 %v270, 0.0
  %v277 = vmax.f32 %v273, 0.0
  %278 = vst [vmem:[%s3] sm:$0xff] %v276
  %279 = vst [vmem:[%s3 + $0x8] sm:$0xff] %v277
  // Predicated region
  $region14: #{stem_block_forward.5} parent=0 // pred_check
    _
  $region15: #{stem_block_forward.5} parent=0 // pred_check_branch
    %281 = sbr.rel (0) target = $region17
  $region16: #{stem_block_forward.5} parent=0 // pred_region
    _
  $region17: #{stem_block_forward.5} parent=0 // pred_fallthru
    _
  // Predicated region
  $region18: #{stem_block_forward.5} parent=0 // pred_check
    _
  $region19: #{stem_block_forward.5} parent=0 // pred_check_branch
    %283 = sbr.rel (0) target = $region21
  $region20: #{stem_block_forward.5} parent=0 // pred_region
    _
  $region21: #{stem_block_forward.5} parent=0 // pred_fallthru
    _

</llo_original>
